<compile_context>
chip_gen: v5e
topology: v5e:2x2
jax: 0.10.0
libtpu: 0.0.40
codegen_flags: <defaults>
</compile_context>

<pallas_src>
import jax
import jax.numpy as jnp
from jax.experimental import pallas as pl
from jax.experimental.pallas import tpu as pltpu

OBS_DIM = 8
ACT_DIM = 8
IN_DIM = OBS_DIM + ACT_DIM            # 16
HIDDEN = 32
HIDDEN_LAYERS = 2                     # two backbone EnsembleLinear layers
ENSEMBLE = 7
OUT_HALF = OBS_DIM + 1                # 9 (with_reward=True)
OUT_DIM = 2 * OUT_HALF                # 18
PACKED_H = ENSEMBLE * HIDDEN          # 224
PACKED_OUT = ENSEMBLE * OUT_DIM       # 126
PH_PAD = 256                          # padded hidden lanes (whole vregs / MXU tile)
POUT_PAD = 128                        # padded output lanes (one full vreg width)
BATCH = 8


def _leaky_relu(x, slope=0.1):
    return jnp.where(x > 0, x, slope * x)


def _softplus(x):
    # numerically stable softplus
    return jnp.maximum(x, 0.0) + jnp.log1p(jnp.exp(-jnp.abs(x)))


def _soft_clamp(x, lo, hi):
    # soft_clamp(x, _min, _max) = _min + softplus((_max - softplus(_max - x)) - _min)
    x = hi - _softplus(hi - x)
    x = lo + _softplus(x - lo)
    return x


def ensemble_transition_kernel(obs_ref, act_ref, w0_ref, w1_ref, wo_ref,
                               b01_ref, misc_ref, out_ref):
    obs = obs_ref[...]                                                    # (B, OBS_DIM)
    act = act_ref[...]                                                    # (B, ACT_DIM)

    # layer 0: ensemble packed into lanes; W0 split into obs/act row halves
    h = (jnp.dot(obs, w0_ref[0:OBS_DIM, :], preferred_element_type=jnp.float32)
         + jnp.dot(act, w0_ref[OBS_DIM:IN_DIM, :], preferred_element_type=jnp.float32)
         + b01_ref[0:1, :])
    h = _leaky_relu(h)                                                    # (B, PH_PAD)

    # layer 1: block-diagonal packed weights -> one MXU pass
    h = jnp.dot(h, w1_ref[...], preferred_element_type=jnp.float32) + b01_ref[1:2, :]
    h = _leaky_relu(h)                                                    # (B, PH_PAD)

    # output layer; rows [PH_PAD : PH_PAD+OBS_DIM) of wo_ref are the 0/1 residual
    # scatter matrix R (mode='local' obs residual folded into a tiny MXU pass)
    o = (jnp.dot(h, wo_ref[0:PH_PAD, :], preferred_element_type=jnp.float32)
         + jnp.dot(obs, wo_ref[PH_PAD:PH_PAD + OBS_DIM, :],
                   preferred_element_type=jnp.float32)
         + misc_ref[0:1, :])                                              # (B, POUT_PAD)

    # soft-clamped std on all lanes (mu columns discarded by the mask; EUP slot is free)
    lo = misc_ref[1:2, :]
    hi = misc_ref[2:3, :]
    std = jnp.exp(_soft_clamp(o, lo, hi))

    is_logstd = misc_ref[3:4, :] > 0.5
    out_ref[...] = jnp.where(is_logstd, std, o)                           # lane-dense store


def pack_params(params):
    """One-time (init-time) packing of the ensemble into the lane dimension.

    Returns 5 arrays:
      w0p   (IN_DIM, PH_PAD)            rows 0..7 obs part, rows 8..15 action part
      w1bd  (PH_PAD, PH_PAD)            block-diagonal layer-1 weight, zero-padded
      wo_aug(PH_PAD+OBS_DIM, POUT_PAD)  block-diagonal output weight + residual scatter R
      b01   (2, PH_PAD)                 row 0: bias0, row 1: bias1
      misc  (4, POUT_PAD)               rows: out bias, min_logstd, max_logstd, logstd mask
    """
    w0, b0, w1, b1, wo, bo, min_logstd, max_logstd = params
    eye = jnp.eye(ENSEMBLE, dtype=jnp.float32)
    hpad = PH_PAD - PACKED_H
    opad = POUT_PAD - PACKED_OUT

    # layer 0: concatenate members along output lanes, pad to 256 lanes
    w0p = jnp.transpose(w0, (1, 0, 2)).reshape(IN_DIM, PACKED_H)
    w0p = jnp.pad(w0p, ((0, 0), (0, hpad)))                               # (16, 256)
    b0p = jnp.pad(b0.reshape(1, PACKED_H), ((0, 0), (0, hpad)))
    b1p = jnp.pad(b1.reshape(1, PACKED_H), ((0, 0), (0, hpad)))
    b01 = jnp.concatenate([b0p, b1p], axis=0)                             # (2, 256)

    # layer 1: block-diagonal packing, zero-padded
    w1bd = jnp.einsum('ef,eij->eifj', eye, w1).reshape(PACKED_H, PACKED_H)
    w1bd = jnp.pad(w1bd, ((0, hpad), (0, hpad)))                          # (256, 256)

    # output layer: block-diagonal packing + residual scatter rows appended
    wobd = jnp.einsum('ef,eij->eifj', eye, wo).reshape(PACKED_H, PACKED_OUT)
    wobd = jnp.pad(wobd, ((0, hpad), (0, opad)))                          # (256, 128)
    r_block = jnp.eye(OBS_DIM, OUT_DIM, dtype=jnp.float32)                # obs -> mu-obs cols
    r = jnp.pad(jnp.tile(r_block, (1, ENSEMBLE)), ((0, 0), (0, opad)))    # (8, 128)
    wo_aug = jnp.concatenate([wobd, r], axis=0)                           # (264, 128)

    # misc slab: output bias, logstd bounds (replicated over packed cols), logstd mask
    bop = jnp.pad(bo.reshape(1, PACKED_OUT), ((0, 0), (0, opad)))
    min_p = jnp.tile(jnp.concatenate([min_logstd, min_logstd]), (ENSEMBLE,))
    max_p = jnp.tile(jnp.concatenate([max_logstd, max_logstd]), (ENSEMBLE,))
    min_p = jnp.pad(min_p, (0, opad), constant_values=-5.0)[None, :]
    max_p = jnp.pad(max_p, (0, opad), constant_values=1.0)[None, :]
    member_mask = jnp.concatenate([jnp.zeros((OUT_HALF,), jnp.float32),
                                   jnp.ones((OUT_HALF,), jnp.float32)])
    mask = jnp.pad(jnp.tile(member_mask, (ENSEMBLE,)), (0, opad))[None, :]
    misc = jnp.concatenate([bop, min_p, max_p, mask], axis=0)             # (4, 128)

    return (w0p.astype(jnp.float32), w1bd.astype(jnp.float32),
            wo_aug.astype(jnp.float32), b01.astype(jnp.float32),
            misc.astype(jnp.float32))


@jax.jit
def ensemble_transition(obs, action, packed):
    """obs: (B, OBS_DIM), action: (B, ACT_DIM), packed: pack_params(...) output.
    Returns (mu, std), each (ENSEMBLE, B, OBS_DIM+1)."""
    w0p, w1bd, wo_aug, b01, misc = packed
    B = obs.shape[0]

    vmem = pl.BlockSpec(memory_space=pltpu.MemorySpace.VMEM)
    out = pl.pallas_call(
        ensemble_transition_kernel,
        out_shape=jax.ShapeDtypeStruct((B, POUT_PAD), jnp.float32),
        in_specs=[vmem] * 7,
        out_specs=vmem,
    )(obs.astype(jnp.float32), action.astype(jnp.float32),
      w0p, w1bd, wo_aug, b01, misc)

    # unpack lane-dense slab -> (E, B, OUT_DIM) -> mu/std (wrapper-side layout plumbing)
    out = out[:, :PACKED_OUT].reshape(B, ENSEMBLE, OUT_DIM).transpose(1, 0, 2)
    return out[..., :OUT_HALF], out[..., OUT_HALF:]


def init_params(key):
    """Deterministic init mirroring EnsembleTransition.__init__ shapes.
    Weights: trunc_normal(std=1/(2*sqrt(in_features))), biases: zeros,
    max_logstd = +1, min_logstd = -5."""
    k0, k1, k2 = jax.random.split(key, 3)

    def trunc(k, shape, in_features):
        std = 1.0 / (2.0 * (in_features ** 0.5))
        return jax.random.truncated_normal(k, -2.0, 2.0, shape, jnp.float32) * std

    w0 = trunc(k0, (ENSEMBLE, IN_DIM, HIDDEN), IN_DIM)
    b0 = jnp.zeros((ENSEMBLE, 1, HIDDEN), jnp.float32)
    w1 = trunc(k1, (ENSEMBLE, HIDDEN, HIDDEN), HIDDEN)
    b1 = jnp.zeros((ENSEMBLE, 1, HIDDEN), jnp.float32)
    wo = trunc(k2, (ENSEMBLE, HIDDEN, OUT_DIM), HIDDEN)
    bo = jnp.zeros((ENSEMBLE, 1, OUT_DIM), jnp.float32)
    max_logstd = jnp.ones((OUT_HALF,), jnp.float32) * 1.0
    min_logstd = jnp.ones((OUT_HALF,), jnp.float32) * -5.0
    return (w0, b0, w1, b1, wo, bo, min_logstd, max_logstd)


def reference(obs, action, params):
    """Pure-JAX reference of the PyTorch forward (returns mu, std)."""
    w0, b0, w1, b1, wo, bo, min_logstd, max_logstd = params
    x = jnp.concatenate([obs, action], axis=-1)          # (B, IN_DIM)
    h = jnp.einsum('ij,bjk->bik', x, w0) + b0            # (E, B, H)
    h = _leaky_relu(h)
    h = jnp.einsum('bij,bjk->bik', h, w1) + b1
    h = _leaky_relu(h)
    o = jnp.einsum('bij,bjk->bik', h, wo) + bo           # (E, B, OUT_DIM)
    mu, logstd = o[..., :OUT_HALF], o[..., OUT_HALF:]
    logstd = _soft_clamp(logstd, min_logstd, max_logstd)
    mu_obs = mu[..., :OBS_DIM] + x[None, :, :OBS_DIM]
    mu = jnp.concatenate([mu_obs, mu[..., OBS_DIM:]], axis=-1)
    return mu, jnp.exp(logstd)


if __name__ == "__main__":
    key = jax.random.PRNGKey(0)
    k_obs, k_act, k_par = jax.random.split(key, 3)
    obs = jax.random.normal(k_obs, (BATCH, OBS_DIM), jnp.float32)
    action = jax.random.normal(k_act, (BATCH, ACT_DIM), jnp.float32)
    params = init_params(k_par)

    # one-time packing (outside the jitted hot path)
    packed = jax.tree_util.tree_map(jax.block_until_ready, pack_params(params))

    mu, std = ensemble_transition(obs, action, packed)
    jax.block_until_ready((mu, std))

    mu_ref, std_ref = reference(obs, action, params)
    assert mu.shape == (ENSEMBLE, BATCH, OUT_HALF)
    assert std.shape == (ENSEMBLE, BATCH, OUT_HALF)
    assert jnp.allclose(mu, mu_ref, rtol=1e-4, atol=1e-4)
    assert jnp.allclose(std, std_ref, rtol=1e-4, atol=1e-4)

    print("KERNEL_OK")
</pallas_src>

<mosaic_0001>
module attributes {stable_mosaic.version = 11 : i64} {
  func.func @ensemble_transition_kernel(%arg0: memref<8x8xf32, #tpu.memory_space<vmem>>, %arg1: memref<8x8xf32, #tpu.memory_space<vmem>>, %arg2: memref<16x256xf32, #tpu.memory_space<vmem>>, %arg3: memref<256x256xf32, #tpu.memory_space<vmem>>, %arg4: memref<264x128xf32, #tpu.memory_space<vmem>>, %arg5: memref<2x256xf32, #tpu.memory_space<vmem>>, %arg6: memref<4x128xf32, #tpu.memory_space<vmem>>, %arg7: memref<8x128xf32, #tpu.memory_space<vmem>>) attributes {dimension_semantics = [], scalar_prefetch = 0 : i64, scratch_operands = 0 : i64, tpu.core_type = #tpu.core_type<tc>} {
    %c0 = arith.constant 0 : index
    %c0_0 = arith.constant 0 : index
    %0 = vector.load %arg0[%c0, %c0_0] : memref<8x8xf32, #tpu.memory_space<vmem>>, vector<8x8xf32>
    %c0_1 = arith.constant 0 : index
    %c0_2 = arith.constant 0 : index
    %1 = vector.load %arg1[%c0_1, %c0_2] : memref<8x8xf32, #tpu.memory_space<vmem>>, vector<8x8xf32>
    %c0_3 = arith.constant 0 : index
    %c0_4 = arith.constant 0 : index
    %2 = vector.load %arg2[%c0_3, %c0_4] : memref<16x256xf32, #tpu.memory_space<vmem>>, vector<8x256xf32>
    %cst = arith.constant dense<0.000000e+00> : vector<8x256xf32>
    %3 = tpu.matmul %0, %2, %cst {dimension_numbers = #tpu.dot_dimension_numbers<[1], [0], [0], [1], [0, 0, 1, 1], [], []>} : vector<8x8xf32>, vector<8x256xf32>, vector<8x256xf32> -> vector<8x256xf32>
    %c8 = arith.constant 8 : index
    %c0_5 = arith.constant 0 : index
    %4 = vector.load %arg2[%c8, %c0_5] : memref<16x256xf32, #tpu.memory_space<vmem>>, vector<8x256xf32>
    %cst_6 = arith.constant dense<0.000000e+00> : vector<8x256xf32>
    %5 = tpu.matmul %1, %4, %cst_6 {dimension_numbers = #tpu.dot_dimension_numbers<[1], [0], [0], [1], [0, 0, 1, 1], [], []>} : vector<8x8xf32>, vector<8x256xf32>, vector<8x256xf32> -> vector<8x256xf32>
    %6 = arith.addf %3, %5 : vector<8x256xf32>
    %c0_7 = arith.constant 0 : index
    %c0_8 = arith.constant 0 : index
    %7 = vector.load %arg5[%c0_7, %c0_8] : memref<2x256xf32, #tpu.memory_space<vmem>>, vector<1x256xf32>
    %8 = vector.broadcast %7 : vector<1x256xf32> to vector<8x256xf32>
    %9 = arith.addf %6, %8 : vector<8x256xf32>
    %cst_9 = arith.constant 0.000000e+00 : f32
    %10 = vector.broadcast %cst_9 : f32 to vector<8x256xf32>
    %11 = arith.cmpf ogt, %9, %10 : vector<8x256xf32>
    %cst_10 = arith.constant 1.000000e-01 : f32
    %12 = vector.broadcast %cst_10 : f32 to vector<8x256xf32>
    %13 = arith.mulf %12, %9 : vector<8x256xf32>
    %14 = arith.select %11, %9, %13 : vector<8x256xi1>, vector<8x256xf32>
    %c0_11 = arith.constant 0 : index
    %c0_12 = arith.constant 0 : index
    %15 = vector.load %arg3[%c0_11, %c0_12] : memref<256x256xf32, #tpu.memory_space<vmem>>, vector<256x256xf32>
    %cst_13 = arith.constant dense<0.000000e+00> : vector<8x256xf32>
    %16 = tpu.matmul %14, %15, %cst_13 {dimension_numbers = #tpu.dot_dimension_numbers<[1], [0], [0], [1], [0, 0, 1, 1], [], []>} : vector<8x256xf32>, vector<256x256xf32>, vector<8x256xf32> -> vector<8x256xf32>
    %c1 = arith.constant 1 : index
    %c0_14 = arith.constant 0 : index
    %17 = vector.load %arg5[%c1, %c0_14] : memref<2x256xf32, #tpu.memory_space<vmem>>, vector<1x256xf32>
    %18 = vector.broadcast %17 : vector<1x256xf32> to vector<8x256xf32>
    %19 = arith.addf %16, %18 : vector<8x256xf32>
    %cst_15 = arith.constant 0.000000e+00 : f32
    %20 = vector.broadcast %cst_15 : f32 to vector<8x256xf32>
    %21 = arith.cmpf ogt, %19, %20 : vector<8x256xf32>
    %cst_16 = arith.constant 1.000000e-01 : f32
    %22 = vector.broadcast %cst_16 : f32 to vector<8x256xf32>
    %23 = arith.mulf %22, %19 : vector<8x256xf32>
    %24 = arith.select %21, %19, %23 : vector<8x256xi1>, vector<8x256xf32>
    %c0_17 = arith.constant 0 : index
    %c0_18 = arith.constant 0 : index
    %25 = vector.load %arg4[%c0_17, %c0_18] : memref<264x128xf32, #tpu.memory_space<vmem>>, vector<256x128xf32>
    %cst_19 = arith.constant dense<0.000000e+00> : vector<8x128xf32>
    %26 = tpu.matmul %24, %25, %cst_19 {dimension_numbers = #tpu.dot_dimension_numbers<[1], [0], [0], [1], [0, 0, 1, 1], [], []>} : vector<8x256xf32>, vector<256x128xf32>, vector<8x128xf32> -> vector<8x128xf32>
    %c256 = arith.constant 256 : index
    %c0_20 = arith.constant 0 : index
    %27 = vector.load %arg4[%c256, %c0_20] : memref<264x128xf32, #tpu.memory_space<vmem>>, vector<8x128xf32>
    %cst_21 = arith.constant dense<0.000000e+00> : vector<8x128xf32>
    %28 = tpu.matmul %0, %27, %cst_21 {dimension_numbers = #tpu.dot_dimension_numbers<[1], [0], [0], [1], [0, 0, 1, 1], [], []>} : vector<8x8xf32>, vector<8x128xf32>, vector<8x128xf32> -> vector<8x128xf32>
    %29 = arith.addf %26, %28 : vector<8x128xf32>
    %c0_22 = arith.constant 0 : index
    %c0_23 = arith.constant 0 : index
    %30 = vector.load %arg6[%c0_22, %c0_23] : memref<4x128xf32, #tpu.memory_space<vmem>>, vector<1x128xf32>
    %31 = vector.broadcast %30 : vector<1x128xf32> to vector<8x128xf32>
    %32 = arith.addf %29, %31 : vector<8x128xf32>
    %c1_24 = arith.constant 1 : index
    %c0_25 = arith.constant 0 : index
    %33 = vector.load %arg6[%c1_24, %c0_25] : memref<4x128xf32, #tpu.memory_space<vmem>>, vector<1x128xf32>
    %c2 = arith.constant 2 : index
    %c0_26 = arith.constant 0 : index
    %34 = vector.load %arg6[%c2, %c0_26] : memref<4x128xf32, #tpu.memory_space<vmem>>, vector<1x128xf32>
    %35 = vector.broadcast %34 : vector<1x128xf32> to vector<8x128xf32>
    %36 = arith.subf %35, %32 : vector<8x128xf32>
    %cst_27 = arith.constant 0.000000e+00 : f32
    %37 = vector.broadcast %cst_27 : f32 to vector<8x128xf32>
    %38 = arith.maximumf %36, %37 : vector<8x128xf32>
    %39 = math.absf %36 : vector<8x128xf32>
    %cst_28 = arith.constant 0.000000e+00 : f32
    %40 = vector.broadcast %cst_28 : f32 to vector<8x128xf32>
    %41 = arith.subf %40, %39 : vector<8x128xf32>
    %42 = math.exp %41 : vector<8x128xf32>
    %43 = math.log1p %42 : vector<8x128xf32>
    %44 = arith.addf %38, %43 : vector<8x128xf32>
    %45 = vector.broadcast %34 : vector<1x128xf32> to vector<8x128xf32>
    %46 = arith.subf %45, %44 : vector<8x128xf32>
    %47 = vector.broadcast %33 : vector<1x128xf32> to vector<8x128xf32>
    %48 = arith.subf %46, %47 : vector<8x128xf32>
    %cst_29 = arith.constant 0.000000e+00 : f32
    %49 = vector.broadcast %cst_29 : f32 to vector<8x128xf32>
    %50 = arith.maximumf %48, %49 : vector<8x128xf32>
    %51 = math.absf %48 : vector<8x128xf32>
    %cst_30 = arith.constant 0.000000e+00 : f32
    %52 = vector.broadcast %cst_30 : f32 to vector<8x128xf32>
    %53 = arith.subf %52, %51 : vector<8x128xf32>
    %54 = math.exp %53 : vector<8x128xf32>
    %55 = math.log1p %54 : vector<8x128xf32>
    %56 = arith.addf %50, %55 : vector<8x128xf32>
    %57 = vector.broadcast %33 : vector<1x128xf32> to vector<8x128xf32>
    %58 = arith.addf %57, %56 : vector<8x128xf32>
    %59 = math.exp %58 : vector<8x128xf32>
    %c3 = arith.constant 3 : index
    %c0_31 = arith.constant 0 : index
    %60 = vector.load %arg6[%c3, %c0_31] : memref<4x128xf32, #tpu.memory_space<vmem>>, vector<1x128xf32>
    %cst_32 = arith.constant 5.000000e-01 : f32
    %61 = vector.broadcast %cst_32 : f32 to vector<1x128xf32>
    %62 = arith.cmpf ogt, %60, %61 : vector<1x128xf32>
    %63 = vector.shape_cast %62 : vector<1x128xi1> to vector<1x128xi1>
    %64 = vector.broadcast %63 : vector<1x128xi1> to vector<8x128xi1>
    %65 = arith.select %64, %59, %32 : vector<8x128xi1>, vector<8x128xf32>
    %c0_33 = arith.constant 0 : index
    %c0_34 = arith.constant 0 : index
    %66 = vector.load %arg7[%c0_33, %c0_34] : memref<8x128xf32, #tpu.memory_space<vmem>>, vector<8x128xf32>
    tpu.vector_store %arg7[%c0_33, %c0_34], %65 {strides = array<i32>} : memref<8x128xf32, #tpu.memory_space<vmem>>, vector<8x128xf32>,
    return
  }
}

</mosaic_0001>

<llo_original>
// kernel: ensemble_transition.1
$region0: #{ensemble_transition.1}
  #allocation0 [shape = 'u32[]', space=smem, size = 0x4, offset = 0x4, fixed_abs, tag = 'smem constant byte address 0x4 - core index']
  #allocation1 [shape = 'u32[72,128]{1,0:T(1,128)}', space=vmem, size = 0x9000, scoped, tag = 'internal scratch']
  %s0 = inlined_call_operand.hbm [shape: f32[8,8], index: 0, kind: input, shape index: {}]
  %s1 = inlined_call_operand.hbm [shape: f32[8,8], index: 1, kind: input, shape index: {}]
  %s2 = inlined_call_operand.hbm [shape: f32[16,256], index: 2, kind: input, shape index: {}]
  %s3 = inlined_call_operand.hbm [shape: f32[256,256], index: 3, kind: input, shape index: {}]
  %s4 = inlined_call_operand.hbm [shape: f32[264,128], index: 4, kind: input, shape index: {}]
  %s5 = inlined_call_operand.vmem [shape: f32[2,256], index: 5, kind: input, shape index: {}]
  %s6 = inlined_call_operand.hbm [shape: f32[4,128], index: 6, kind: input, shape index: {}]
  %s7 = inlined_call_operand.vmem [shape: f32[8,128], index: 7, kind: output, shape index: {}]
  %s8 = sld [smem:[#allocation0]]
  $region62: #{ensemble_transition.1} parent=0
    _
  %s10 = ssub.s32 1, %s8
  %s11 = scalar_select 0, %s10, %s8
  $region1: #{ensemble_transition.1} parent=0
    #allocation2 [shape = 'u8[4096]{0}', space=vmem, size = 0x1000, scoped, tag = 'input window, operand 0, single buffered']
    #allocation3 [shape = 's32[1]{0}', space=sflag, size = 0x4, scoped, tag = 'scoped memory for ensemble_transition.1']
    #allocation4 [shape = 'u8[4096]{0}', space=vmem, size = 0x1000, scoped, tag = 'input window, operand 1, single buffered']
    #allocation5 [shape = 's32[1]{0}', space=sflag, size = 0x4, scoped, tag = 'scoped memory for ensemble_transition.1']
    #allocation6 [shape = 'u8[16384]{0}', space=vmem, size = 0x4000, scoped, tag = 'input window, operand 2, single buffered']
    #allocation7 [shape = 'u8[262144]{0}', space=vmem, size = 0x40000, scoped, tag = 'input window, operand 3, single buffered']
    #allocation8 [shape = 's32[1]{0}', space=sflag, size = 0x4, scoped, tag = 'scoped memory for ensemble_transition.1']
    #allocation9 [shape = 'u8[135168]{0}', space=vmem, size = 0x21000, scoped, tag = 'input window, operand 4, single buffered']
    #allocation10 [shape = 'u8[2048]{0}', space=vmem, size = 0x800, scoped, tag = 'input window, operand 6, single buffered']
    #allocation11 [shape = 's32[1]{0}', space=sflag, size = 0x4, scoped, tag = 'scoped memory for ensemble_transition.1']
    %12 = vsyncpa [#allocation3], 0
    %13 = vsyncpa [#allocation5], 0
    %14 = vsyncpa [#allocation8], 0
    %15 = vsyncpa [#allocation11], 0
    // Predicated region
    $region2: #{ensemble_transition.1} parent=1 // pred_check
      _
    $region3: #{ensemble_transition.1} parent=1 // pred_check_branch
      %17 = sbr.rel (0) target = $region5
    $region4: #{ensemble_transition.1} parent=1 // pred_region
      %19 = vsyncadd [#allocation3], 0
      %s21 = sshll.u32 %s0, 4
      %s22 = int_to_ptr.hbm [resolvable:$true] %s21
      %s23 = sshll.u32 [#allocation2], 4
      %s24 = int_to_ptr.vmem [resolvable:$true] %s23
      %26 = dma.hbm_to_vmem [thread:$0]  %s22, 128, %s24, [#allocation3]
    $region5: #{ensemble_transition.1} parent=1 // pred_fallthru
      _
    // Predicated region
    $region6: #{ensemble_transition.1} parent=1 // pred_check
      _
    $region7: #{ensemble_transition.1} parent=1 // pred_check_branch
      %28 = sbr.rel (0) target = $region9
    $region8: #{ensemble_transition.1} parent=1 // pred_region
      %30 = vsyncadd [#allocation5], 0
      %s32 = sshll.u32 %s1, 4
      %s33 = int_to_ptr.hbm [resolvable:$true] %s32
      %s34 = sshll.u32 [#allocation4], 4
      %s35 = int_to_ptr.vmem [resolvable:$true] %s34
      %37 = dma.hbm_to_vmem [thread:$0]  %s33, 128, %s35, [#allocation5]
    $region9: #{ensemble_transition.1} parent=1 // pred_fallthru
      _
    // Predicated region
    $region10: #{ensemble_transition.1} parent=1 // pred_check
      _
    $region11: #{ensemble_transition.1} parent=1 // pred_check_branch
      %39 = sbr.rel (0) target = $region13
    $region12: #{ensemble_transition.1} parent=1 // pred_region
      %41 = vsyncadd [#allocation5], 0
      %s42 = sshll.u32 %s2, 4
      %s43 = int_to_ptr.hbm [resolvable:$true] %s42
      %s44 = sshll.u32 [#allocation6], 4
      %s45 = int_to_ptr.vmem [resolvable:$true] %s44
      %50 = dma.hbm_to_vmem [thread:$0]  %s43, 512, %s45, [#allocation5], 256, 256, 16
    $region13: #{ensemble_transition.1} parent=1 // pred_fallthru
      _
    // Predicated region
    $region14: #{ensemble_transition.1} parent=1 // pred_check
      _
    $region15: #{ensemble_transition.1} parent=1 // pred_check_branch
      %52 = sbr.rel (0) target = $region17
    $region16: #{ensemble_transition.1} parent=1 // pred_region
      %54 = vsyncadd [#allocation8], 0
      %s55 = sshll.u32 %s3, 4
      %s56 = int_to_ptr.hbm [resolvable:$true] %s55
      %s57 = sshll.u32 [#allocation7], 4
      %s58 = int_to_ptr.vmem [resolvable:$true] %s57
      %63 = dma.hbm_to_vmem [thread:$0]  %s56, 8192, %s58, [#allocation8], 256, 256, 16
    $region17: #{ensemble_transition.1} parent=1 // pred_fallthru
      _
    // Predicated region
    $region18: #{ensemble_transition.1} parent=1 // pred_check
      _
    $region19: #{ensemble_transition.1} parent=1 // pred_check_branch
      %65 = sbr.rel (0) target = $region21
    $region20: #{ensemble_transition.1} parent=1 // pred_region
      %67 = vsyncadd [#allocation8], 0
      %s68 = sshll.u32 %s4, 4
      %s69 = int_to_ptr.hbm [resolvable:$true] %s68
      %s70 = sshll.u32 [#allocation9], 4
      %s71 = int_to_ptr.vmem [resolvable:$true] %s70
      %76 = dma.hbm_to_vmem [thread:$0]  %s69, 4224, %s71, [#allocation8], 128, 128, 8
    $region21: #{ensemble_transition.1} parent=1 // pred_fallthru
      _
    // Predicated region
    $region22: #{ensemble_transition.1} parent=1 // pred_check
      _
    $region23: #{ensemble_transition.1} parent=1 // pred_check_branch
      %78 = sbr.rel (0) target = $region25
    $region24: #{ensemble_transition.1} parent=1 // pred_region
      _
    $region25: #{ensemble_transition.1} parent=1 // pred_fallthru
      _
    // Predicated region
    $region26: #{ensemble_transition.1} parent=1 // pred_check
      _
    $region27: #{ensemble_transition.1} parent=1 // pred_check_branch
      %80 = sbr.rel (0) target = $region29
    $region28: #{ensemble_transition.1} parent=1 // pred_region
      %82 = vsyncadd [#allocation11], 0
      %s84 = sshll.u32 %s6, 4
      %s85 = int_to_ptr.hbm [resolvable:$true] %s84
      %s86 = sshll.u32 [#allocation10], 4
      %s87 = int_to_ptr.vmem [resolvable:$true] %s86
      %89 = dma.hbm_to_vmem [thread:$0]  %s85, 64, %s87, [#allocation11]
    $region29: #{ensemble_transition.1} parent=1 // pred_fallthru
      _
    // Predicated region
    $region30: #{ensemble_transition.1} parent=1 // pred_check
      _
    $region31: #{ensemble_transition.1} parent=1 // pred_check_branch
      %91 = sbr.rel (0) target = $region33
    $region32: #{ensemble_transition.1} parent=1 // pred_region
      %93 = dma.done [#allocation3], 128
    $region33: #{ensemble_transition.1} parent=1 // pred_fallthru
      _
    // Predicated region
    $region34: #{ensemble_transition.1} parent=1 // pred_check
      _
    $region35: #{ensemble_transition.1} parent=1 // pred_check_branch
      %95 = sbr.rel (0) target = $region37
    $region36: #{ensemble_transition.1} parent=1 // pred_region
      %97 = dma.done [#allocation5], 128
    $region37: #{ensemble_transition.1} parent=1 // pred_fallthru
      _
    // Predicated region
    $region38: #{ensemble_transition.1} parent=1 // pred_check
      _
    $region39: #{ensemble_transition.1} parent=1 // pred_check_branch
      %99 = sbr.rel (0) target = $region41
    $region40: #{ensemble_transition.1} parent=1 // pred_region
      %101 = dma.done [#allocation5], 512
    $region41: #{ensemble_transition.1} parent=1 // pred_fallthru
      _
    // Predicated region
    $region42: #{ensemble_transition.1} parent=1 // pred_check
      _
    $region43: #{ensemble_transition.1} parent=1 // pred_check_branch
      %103 = sbr.rel (0) target = $region45
    $region44: #{ensemble_transition.1} parent=1 // pred_region
      %105 = dma.done [#allocation8], 8192
    $region45: #{ensemble_transition.1} parent=1 // pred_fallthru
      _
    // Predicated region
    $region46: #{ensemble_transition.1} parent=1 // pred_check
      _
    $region47: #{ensemble_transition.1} parent=1 // pred_check_branch
      %107 = sbr.rel (0) target = $region49
    $region48: #{ensemble_transition.1} parent=1 // pred_region
      %109 = dma.done [#allocation8], 4224
    $region49: #{ensemble_transition.1} parent=1 // pred_fallthru
      _
    // Predicated region
    $region50: #{ensemble_transition.1} parent=1 // pred_check
      _
    $region51: #{ensemble_transition.1} parent=1 // pred_check_branch
      %111 = sbr.rel (0) target = $region53
    $region52: #{ensemble_transition.1} parent=1 // pred_region
      %113 = dma.done [#allocation11], 64
    $region53: #{ensemble_transition.1} parent=1 // pred_fallthru
      _
    %v114 = vld [vmem:[#allocation2] sm:$0xff]
    %v115 = vld [vmem:[#allocation4] sm:$0xff]
    %v116 = vld [vmem:[#allocation6] sm:$0xff]
    %v117 = vld [vmem:[#allocation6 + $0x8] sm:$0xff]
    %v118 = vld [vmem:[#allocation6 + $0x10] sm:$0xff]
    %v119 = vld [vmem:[#allocation6 + $0x18] sm:$0xff]
    %vm120 = vcmask 64512
    %v122 = vsel %vm120, %v115, 0
    %124 = vmatpush.msra.mxu0 0.0
    %125 = vmatpush.msra.mxu0 0.0
    %126 = vmatpush.msra.mxu0 0.0
    %127 = vmatpush.msra.mxu0 0.0
    %128 = vmatpush.msra.mxu0 0.0
    %129 = vmatpush.msra.mxu0 0.0
    %130 = vmatpush.msra.mxu0 0.0
    %131 = vmatpush.msra.mxu0 0.0
    %132 = vmatpush.msra.mxu0 0.0
    %133 = vmatpush.msra.mxu0 0.0
    %134 = vmatpush.msra.mxu0 0.0
    %135 = vmatpush.msra.mxu0 0.0
    %136 = vmatpush.msra.mxu0 0.0
    %137 = vmatpush.msra.mxu0 0.0
    %138 = vmatpush.msra.mxu0 0.0
    %139 = vmatpush.msra.mxu0 %v118
    %140 = vmatmul.f32.gmra.mxu0 %v122
    %v141 = vpop.f32.mrf.mxu0
    %v142 = vadd.f32 0.0, %v141
    %143 = vdwg.mxu0
    %144 = vmatpush.msra.mxu0 0.0
    %145 = vmatpush.msra.mxu0 0.0
    %146 = vmatpush.msra.mxu0 0.0
    %147 = vmatpush.msra.mxu0 0.0
    %148 = vmatpush.msra.mxu0 0.0
    %149 = vmatpush.msra.mxu0 0.0
    %150 = vmatpush.msra.mxu0 0.0
    %151 = vmatpush.msra.mxu0 0.0
    %152 = vmatpush.msra.mxu0 0.0
    %153 = vmatpush.msra.mxu0 0.0
    %154 = vmatpush.msra.mxu0 0.0
    %155 = vmatpush.msra.mxu0 0.0
    %156 = vmatpush.msra.mxu0 0.0
    %157 = vmatpush.msra.mxu0 0.0
    %158 = vmatpush.msra.mxu0 0.0
    %159 = vmatpush.msra.mxu0 %v119
    %160 = vmatmul.f32.gmra.mxu0 %v122
    %v161 = vpop.f32.mrf.mxu0
    %v162 = vadd.f32 0.0, %v161
    %163 = vdwg.mxu0
    %v165 = vsel %vm120, %v114, 0
    %167 = vmatpush.msra.mxu0 0.0
    %168 = vmatpush.msra.mxu0 0.0
    %169 = vmatpush.msra.mxu0 0.0
    %170 = vmatpush.msra.mxu0 0.0
    %171 = vmatpush.msra.mxu0 0.0
    %172 = vmatpush.msra.mxu0 0.0
    %173 = vmatpush.msra.mxu0 0.0
    %174 = vmatpush.msra.mxu0 0.0
    %175 = vmatpush.msra.mxu0 0.0
    %176 = vmatpush.msra.mxu0 0.0
    %177 = vmatpush.msra.mxu0 0.0
    %178 = vmatpush.msra.mxu0 0.0
    %179 = vmatpush.msra.mxu0 0.0
    %180 = vmatpush.msra.mxu0 0.0
    %181 = vmatpush.msra.mxu0 0.0
    %182 = vmatpush.msra.mxu0 %v116
    %183 = vmatmul.f32.gmra.mxu0 %v165
    %v184 = vpop.f32.mrf.mxu0
    %v185 = vadd.f32 %v142, %v184
    %186 = vdwg.mxu0
    %187 = vmatpush.msra.mxu0 0.0
    %188 = vmatpush.msra.mxu0 0.0
    %189 = vmatpush.msra.mxu0 0.0
    %190 = vmatpush.msra.mxu0 0.0
    %191 = vmatpush.msra.mxu0 0.0
    %192 = vmatpush.msra.mxu0 0.0
    %193 = vmatpush.msra.mxu0 0.0
    %194 = vmatpush.msra.mxu0 0.0
    %195 = vmatpush.msra.mxu0 0.0
    %196 = vmatpush.msra.mxu0 0.0
    %197 = vmatpush.msra.mxu0 0.0
    %198 = vmatpush.msra.mxu0 0.0
    %199 = vmatpush.msra.mxu0 0.0
    %200 = vmatpush.msra.mxu0 0.0
    %201 = vmatpush.msra.mxu0 0.0
    %202 = vmatpush.msra.mxu0 %v117
    %203 = vmatmul.f32.gmra.mxu0 %v165
    %v204 = vpop.f32.mrf.mxu0
    %v205 = vadd.f32 %v162, %v204
    %206 = vdwg.mxu0
    %v207 = vld [vmem:[%s5] ss:$2 sm:$0x3]
    %v209 = vperm.slane %v207, 0
    %v210 = vperm.slane %v207, 1
    %v213 = vadd.f32 %v185, %v209
    %v214 = vadd.f32 %v205, %v210
    %vm215 = vcmp.gt.f32.partialorder %v213, 0.0
    %vm216 = vcmp.gt.f32.partialorder %v214, 0.0
    %v217 = vmul.f32 %v213, 0.1
    %v218 = vmul.f32 %v214, 0.1
    %v219 = vsel %vm215, %v213, %v217
    %v220 = vsel %vm216, %v214, %v218
    %v221 = vld [vmem:[#allocation7] sm:$0xff]
    %v222 = vld [vmem:[#allocation7 + $0x8] sm:$0xff]
    %v223 = vld [vmem:[#allocation7 + $0x10] sm:$0xff]
    %v224 = vld [vmem:[#allocation7 + $0x18] sm:$0xff]
    %v225 = vld [vmem:[#allocation7 + $0x20] sm:$0xff]
    %v226 = vld [vmem:[#allocation7 + $0x28] sm:$0xff]
    %v227 = vld [vmem:[#allocation7 + $0x30] sm:$0xff]
    %v228 = vld [vmem:[#allocation7 + $0x38] sm:$0xff]
    %v229 = vld [vmem:[#allocation7 + $0x40] sm:$0xff]
    %v230 = vld [vmem:[#allocation7 + $0x48] sm:$0xff]
    %v231 = vld [vmem:[#allocation7 + $0x50] sm:$0xff]
    %v232 = vld [vmem:[#allocation7 + $0x58] sm:$0xff]
    %v233 = vld [vmem:[#allocation7 + $0x60] sm:$0xff]
    %v234 = vld [vmem:[#allocation7 + $0x68] sm:$0xff]
    %v235 = vld [vmem:[#allocation7 + $0x70] sm:$0xff]
    %v236 = vld [vmem:[#allocation7 + $0x78] sm:$0xff]
    %v237 = vld [vmem:[#allocation7 + $0x80] sm:$0xff]
    %v238 = vld [vmem:[#allocation7 + $0x88] sm:$0xff]
    %v239 = vld [vmem:[#allocation7 + $0x90] sm:$0xff]
    %v240 = vld [vmem:[#allocation7 + $0x98] sm:$0xff]
    %v241 = vld [vmem:[#allocation7 + $0xa0] sm:$0xff]
    %v242 = vld [vmem:[#allocation7 + $0xa8] sm:$0xff]
    %v243 = vld [vmem:[#allocation7 + $0xb0] sm:$0xff]
    %v244 = vld [vmem:[#allocation7 + $0xb8] sm:$0xff]
    %v245 = vld [vmem:[#allocation7 + $0xc0] sm:$0xff]
    %v246 = vld [vmem:[#allocation7 + $0xc8] sm:$0xff]
    %v247 = vld [vmem:[#allocation7 + $0xd0] sm:$0xff]
    %v248 = vld [vmem:[#allocation7 + $0xd8] sm:$0xff]
    %v249 = vld [vmem:[#allocation7 + $0xe0] sm:$0xff]
    %v250 = vld [vmem:[#allocation7 + $0xe8] sm:$0xff]
    %v251 = vld [vmem:[#allocation7 + $0xf0] sm:$0xff]
    %v252 = vld [vmem:[#allocation7 + $0xf8] sm:$0xff]
    %v253 = vld [vmem:[#allocation7 + $0x100] sm:$0xff]
    %v254 = vld [vmem:[#allocation7 + $0x108] sm:$0xff]
    %v255 = vld [vmem:[#allocation7 + $0x110] sm:$0xff]
    %v256 = vld [vmem:[#allocation7 + $0x118] sm:$0xff]
    %v257 = vld [vmem:[#allocation7 + $0x120] sm:$0xff]
    %v258 = vld [vmem:[#allocation7 + $0x128] sm:$0xff]
    %v259 = vld [vmem:[#allocation7 + $0x130] sm:$0xff]
    %v260 = vld [vmem:[#allocation7 + $0x138] sm:$0xff]
    %v261 = vld [vmem:[#allocation7 + $0x140] sm:$0xff]
    %v262 = vld [vmem:[#allocation7 + $0x148] sm:$0xff]
    %v263 = vld [vmem:[#allocation7 + $0x150] sm:$0xff]
    %v264 = vld [vmem:[#allocation7 + $0x158] sm:$0xff]
    %v265 = vld [vmem:[#allocation7 + $0x160] sm:$0xff]
    %v266 = vld [vmem:[#allocation7 + $0x168] sm:$0xff]
    %v267 = vld [vmem:[#allocation7 + $0x170] sm:$0xff]
    %v268 = vld [vmem:[#allocation7 + $0x178] sm:$0xff]
    %v269 = vld [vmem:[#allocation7 + $0x180] sm:$0xff]
    %v270 = vld [vmem:[#allocation7 + $0x188] sm:$0xff]
    %v271 = vld [vmem:[#allocation7 + $0x190] sm:$0xff]
    %v272 = vld [vmem:[#allocation7 + $0x198] sm:$0xff]
    %v273 = vld [vmem:[#allocation7 + $0x1a0] sm:$0xff]
    %v274 = vld [vmem:[#allocation7 + $0x1a8] sm:$0xff]
    %v275 = vld [vmem:[#allocation7 + $0x1b0] sm:$0xff]
    %v276 = vld [vmem:[#allocation7 + $0x1b8] sm:$0xff]
    %v277 = vld [vmem:[#allocation7 + $0x1c0] sm:$0xff]
    %v278 = vld [vmem:[#allocation7 + $0x1c8] sm:$0xff]
    %v279 = vld [vmem:[#allocation7 + $0x1d0] sm:$0xff]
    %v280 = vld [vmem:[#allocation7 + $0x1d8] sm:$0xff]
    %v281 = vld [vmem:[#allocation7 + $0x1e0] sm:$0xff]
    %v282 = vld [vmem:[#allocation7 + $0x1e8] sm:$0xff]
    %v283 = vld [vmem:[#allocation7 + $0x1f0] sm:$0xff]
    %v284 = vld [vmem:[#allocation7 + $0x1f8] sm:$0xff]
    %s285 = scalar_lea.vmem %s5, 1
    %v286 = vld [vmem:[%s285] ss:$2 sm:$0x3]
    %v288 = vperm.slane %v286, 0
    %v289 = vperm.slane %v286, 1
    %292 = vmatpush.msra.mxu0 %v251
    %293 = vmatpush.msra.mxu0 %v249
    %294 = vmatpush.msra.mxu0 %v247
    %295 = vmatpush.msra.mxu0 %v245
    %296 = vmatpush.msra.mxu0 %v243
    %297 = vmatpush.msra.mxu0 %v241
    %298 = vmatpush.msra.mxu0 %v239
    %299 = vmatpush.msra.mxu0 %v237
    %300 = vmatpush.msra.mxu0 %v235
    %301 = vmatpush.msra.mxu0 %v233
    %302 = vmatpush.msra.mxu0 %v231
    %303 = vmatpush.msra.mxu0 %v229
    %304 = vmatpush.msra.mxu0 %v227
    %305 = vmatpush.msra.mxu0 %v225
    %306 = vmatpush.msra.mxu0 %v223
    %307 = vmatpush.msra.mxu0 %v221
    %308 = vmatmul.f32.gmra.mxu0 %v219
    %v309 = vpop.f32.mrf.mxu0
    %v310 = vadd.f32 %v288, %v309
    %311 = vdwg.mxu0
    %312 = vmatpush.msra.mxu0 %v283
    %313 = vmatpush.msra.mxu0 %v281
    %314 = vmatpush.msra.mxu0 %v279
    %315 = vmatpush.msra.mxu0 %v277
    %316 = vmatpush.msra.mxu0 %v275
    %317 = vmatpush.msra.mxu0 %v273
    %318 = vmatpush.msra.mxu0 %v271
    %319 = vmatpush.msra.mxu0 %v269
    %320 = vmatpush.msra.mxu0 %v267
    %321 = vmatpush.msra.mxu0 %v265
    %322 = vmatpush.msra.mxu0 %v263
    %323 = vmatpush.msra.mxu0 %v261
    %324 = vmatpush.msra.mxu0 %v259
    %325 = vmatpush.msra.mxu0 %v257
    %326 = vmatpush.msra.mxu0 %v255
    %327 = vmatpush.msra.mxu0 %v253
    %328 = vmatmul.f32.gmra.mxu0 %v220
    %v329 = vpop.f32.mrf.mxu0
    %v330 = vadd.f32 %v310, %v329
    %331 = vdwg.mxu0
    %332 = vmatpush.msra.mxu0 %v252
    %333 = vmatpush.msra.mxu0 %v250
    %334 = vmatpush.msra.mxu0 %v248
    %335 = vmatpush.msra.mxu0 %v246
    %336 = vmatpush.msra.mxu0 %v244
    %337 = vmatpush.msra.mxu0 %v242
    %338 = vmatpush.msra.mxu0 %v240
    %339 = vmatpush.msra.mxu0 %v238
    %340 = vmatpush.msra.mxu0 %v236
    %341 = vmatpush.msra.mxu0 %v234
    %342 = vmatpush.msra.mxu0 %v232
    %343 = vmatpush.msra.mxu0 %v230
    %344 = vmatpush.msra.mxu0 %v228
    %345 = vmatpush.msra.mxu0 %v226
    %346 = vmatpush.msra.mxu0 %v224
    %347 = vmatpush.msra.mxu0 %v222
    %348 = vmatmul.f32.gmra.mxu0 %v219
    %v349 = vpop.f32.mrf.mxu0
    %v350 = vadd.f32 %v289, %v349
    %351 = vdwg.mxu0
    %352 = vmatpush.msra.mxu0 %v284
    %353 = vmatpush.msra.mxu0 %v282
    %354 = vmatpush.msra.mxu0 %v280
    %355 = vmatpush.msra.mxu0 %v278
    %356 = vmatpush.msra.mxu0 %v276
    %357 = vmatpush.msra.mxu0 %v274
    %358 = vmatpush.msra.mxu0 %v272
    %359 = vmatpush.msra.mxu0 %v270
    %360 = vmatpush.msra.mxu0 %v268
    %361 = vmatpush.msra.mxu0 %v266
    %362 = vmatpush.msra.mxu0 %v264
    %363 = vmatpush.msra.mxu0 %v262
    %364 = vmatpush.msra.mxu0 %v260
    %365 = vmatpush.msra.mxu0 %v258
    %366 = vmatpush.msra.mxu0 %v256
    %367 = vmatpush.msra.mxu0 %v254
    %368 = vmatmul.f32.gmra.mxu0 %v220
    %v369 = vpop.f32.mrf.mxu0
    %v370 = vadd.f32 %v350, %v369
    %371 = vdwg.mxu0
    %vm372 = vcmp.gt.f32.partialorder %v330, 0.0
    %vm373 = vcmp.gt.f32.partialorder %v370, 0.0
    %v374 = vmul.f32 %v330, 0.1
    %v375 = vmul.f32 %v370, 0.1
    %v376 = vsel %vm372, %v330, %v374
    %v377 = vsel %vm373, %v370, %v375
    %v378 = vld [vmem:[#allocation9] sm:$0xff]
    %v379 = vld [vmem:[#allocation9 + $0x8] sm:$0xff]
    %v380 = vld [vmem:[#allocation9 + $0x10] sm:$0xff]
    %v381 = vld [vmem:[#allocation9 + $0x18] sm:$0xff]
    %v382 = vld [vmem:[#allocation9 + $0x20] sm:$0xff]
    %v383 = vld [vmem:[#allocation9 + $0x28] sm:$0xff]
    %v384 = vld [vmem:[#allocation9 + $0x30] sm:$0xff]
    %v385 = vld [vmem:[#allocation9 + $0x38] sm:$0xff]
    %v386 = vld [vmem:[#allocation9 + $0x40] sm:$0xff]
    %v387 = vld [vmem:[#allocation9 + $0x48] sm:$0xff]
    %v388 = vld [vmem:[#allocation9 + $0x50] sm:$0xff]
    %v389 = vld [vmem:[#allocation9 + $0x58] sm:$0xff]
    %v390 = vld [vmem:[#allocation9 + $0x60] sm:$0xff]
    %v391 = vld [vmem:[#allocation9 + $0x68] sm:$0xff]
    %v392 = vld [vmem:[#allocation9 + $0x70] sm:$0xff]
    %v393 = vld [vmem:[#allocation9 + $0x78] sm:$0xff]
    %v394 = vld [vmem:[#allocation9 + $0x80] sm:$0xff]
    %v395 = vld [vmem:[#allocation9 + $0x88] sm:$0xff]
    %v396 = vld [vmem:[#allocation9 + $0x90] sm:$0xff]
    %v397 = vld [vmem:[#allocation9 + $0x98] sm:$0xff]
    %v398 = vld [vmem:[#allocation9 + $0xa0] sm:$0xff]
    %v399 = vld [vmem:[#allocation9 + $0xa8] sm:$0xff]
    %v400 = vld [vmem:[#allocation9 + $0xb0] sm:$0xff]
    %v401 = vld [vmem:[#allocation9 + $0xb8] sm:$0xff]
    %v402 = vld [vmem:[#allocation9 + $0xc0] sm:$0xff]
    %v403 = vld [vmem:[#allocation9 + $0xc8] sm:$0xff]
    %v404 = vld [vmem:[#allocation9 + $0xd0] sm:$0xff]
    %v405 = vld [vmem:[#allocation9 + $0xd8] sm:$0xff]
    %v406 = vld [vmem:[#allocation9 + $0xe0] sm:$0xff]
    %v407 = vld [vmem:[#allocation9 + $0xe8] sm:$0xff]
    %v408 = vld [vmem:[#allocation9 + $0xf0] sm:$0xff]
    %v409 = vld [vmem:[#allocation9 + $0xf8] sm:$0xff]
    %v410 = vld [vmem:[#allocation9 + $0x100] sm:$0xff]
    %411 = vmatpush.msra.mxu0 0.0
    %412 = vmatpush.msra.mxu0 0.0
    %413 = vmatpush.msra.mxu0 0.0
    %414 = vmatpush.msra.mxu0 0.0
    %415 = vmatpush.msra.mxu0 0.0
    %416 = vmatpush.msra.mxu0 0.0
    %417 = vmatpush.msra.mxu0 0.0
    %418 = vmatpush.msra.mxu0 0.0
    %419 = vmatpush.msra.mxu0 0.0
    %420 = vmatpush.msra.mxu0 0.0
    %421 = vmatpush.msra.mxu0 0.0
    %422 = vmatpush.msra.mxu0 0.0
    %423 = vmatpush.msra.mxu0 0.0
    %424 = vmatpush.msra.mxu0 0.0
    %425 = vmatpush.msra.mxu0 0.0
    %426 = vmatpush.msra.mxu0 %v410
    %427 = vmatmul.f32.gmra.mxu0 %v165
    %v428 = vpop.f32.mrf.mxu0
    %v429 = vadd.f32 0.0, %v428
    %430 = vdwg.mxu0
    %431 = vmatpush.msra.mxu0 %v393
    %432 = vmatpush.msra.mxu0 %v392
    %433 = vmatpush.msra.mxu0 %v391
    %434 = vmatpush.msra.mxu0 %v390
    %435 = vmatpush.msra.mxu0 %v389
    %436 = vmatpush.msra.mxu0 %v388
    %437 = vmatpush.msra.mxu0 %v387
    %438 = vmatpush.msra.mxu0 %v386
    %439 = vmatpush.msra.mxu0 %v385
    %440 = vmatpush.msra.mxu0 %v384
    %441 = vmatpush.msra.mxu0 %v383
    %442 = vmatpush.msra.mxu0 %v382
    %443 = vmatpush.msra.mxu0 %v381
    %444 = vmatpush.msra.mxu0 %v380
    %445 = vmatpush.msra.mxu0 %v379
    %446 = vmatpush.msra.mxu0 %v378
    %447 = vmatmul.f32.gmra.mxu0 %v376
    %v448 = vpop.f32.mrf.mxu0
    %v449 = vadd.f32 %v429, %v448
    %450 = vdwg.mxu0
    %451 = vmatpush.msra.mxu0 %v409
    %452 = vmatpush.msra.mxu0 %v408
    %453 = vmatpush.msra.mxu0 %v407
    %454 = vmatpush.msra.mxu0 %v406
    %455 = vmatpush.msra.mxu0 %v405
    %456 = vmatpush.msra.mxu0 %v404
    %457 = vmatpush.msra.mxu0 %v403
    %458 = vmatpush.msra.mxu0 %v402
    %459 = vmatpush.msra.mxu0 %v401
    %460 = vmatpush.msra.mxu0 %v400
    %461 = vmatpush.msra.mxu0 %v399
    %462 = vmatpush.msra.mxu0 %v398
    %463 = vmatpush.msra.mxu0 %v397
    %464 = vmatpush.msra.mxu0 %v396
    %465 = vmatpush.msra.mxu0 %v395
    %466 = vmatpush.msra.mxu0 %v394
    %467 = vmatmul.f32.gmra.mxu0 %v377
    %v468 = vpop.f32.mrf.mxu0
    %v469 = vadd.f32 %v449, %v468
    %470 = vdwg.mxu0
    %v471 = vld [vmem:[#allocation10] sm:$0x1]
    %v472 = vperm.slane %v471, 0
    %v473 = vadd.f32 %v469, %v472
    %v474 = vld [vmem:[#allocation10 + $0x1] sm:$0x1]
    %v475 = vld [vmem:[#allocation10 + $0x2] sm:$0x1]
    %v476 = vperm.slane %v475, 0
    %v477 = vsub.f32 %v476, %v473
    %v478 = vmax.f32 %v477, 0.0
    %v479 = vand.u32 2147483647, %v477
    %v480 = vsub.f32 0.0, %v479
    %v481 = vmul.f32 %v480, 1.442695
    %v482 = vpow.pop %v481
    %v483 = vadd.f32 %v482, 1.0
    %v484 = vlog2.pop %v483
    %v485 = vmul.f32 %v484, 0.6931472
    %v486 = vmul.f32 -0.5, %v482
    %v487 = vadd.f32 %v486, 1.0
    %v488 = vmul.f32 %v487, %v482
    %v489 = vand.u32 2147483647, %v482
    %vm490 = vcmp.lt.f32.partialorder %v489, 0.0004427343
    %v491 = vsel %vm490, %v488, %v485
    %v492 = vadd.f32 %v478, %v491
    %v493 = vsub.f32 %v476, %v492
    %v494 = vperm.slane %v474, 0
    %v495 = vsub.f32 %v493, %v494
    %v496 = vmax.f32 %v495, 0.0
    %v497 = vand.u32 2147483647, %v495
    %v498 = vsub.f32 0.0, %v497
    %v499 = vmul.f32 %v498, 1.442695
    %v500 = vpow.pop %v499
    %v501 = vadd.f32 %v500, 1.0
    %v502 = vlog2.pop %v501
    %v503 = vmul.f32 %v502, 0.6931472
    %v504 = vmul.f32 -0.5, %v500
    %v505 = vadd.f32 %v504, 1.0
    %v506 = vmul.f32 %v505, %v500
    %v507 = vand.u32 2147483647, %v500
    %vm508 = vcmp.lt.f32.partialorder %v507, 0.0004427343
    %v509 = vsel %vm508, %v506, %v503
    %v510 = vadd.f32 %v496, %v509
    %v511 = vadd.f32 %v494, %v510
    %v512 = vmul.f32 %v511, 1.442695
    %v513 = vpow.pop %v512
    %v514 = vld [vmem:[#allocation10 + $0x3] sm:$0x1]
    %vm515 = vcmp.gt.f32.partialorder %v514, 0.5
    %v516 = vsel %vm515, 1, 0
    %v517 = vperm.slane %v516, 0
    %vm518 = vcmp.eq.s32.totalorder %v517, 1
    %v519 = vsel %vm518, %v513, %v473
    %520 = vst [vmem:[%s7] sm:$0xff] %v519
    // Predicated region
    $region54: #{ensemble_transition.1} parent=1 // pred_check
      _
    $region55: #{ensemble_transition.1} parent=1 // pred_check_branch
      %522 = sbr.rel (0) target = $region57
    $region56: #{ensemble_transition.1} parent=1 // pred_region
      _
    $region57: #{ensemble_transition.1} parent=1 // pred_fallthru
      _
    // Predicated region
    $region58: #{ensemble_transition.1} parent=1 // pred_check
      _
    $region59: #{ensemble_transition.1} parent=1 // pred_check_branch
      %524 = sbr.rel (0) target = $region61
    $region60: #{ensemble_transition.1} parent=1 // pred_region
      _
    $region61: #{ensemble_transition.1} parent=1 // pred_fallthru
      _
    %525 = vsyncpa [#allocation3], 1
    %526 = vsyncpa [#allocation5], 1
    %527 = vsyncpa [#allocation8], 1
    %528 = vsyncpa [#allocation11], 1

</llo_original>
